<compile_context>
chip_gen: v6e
topology: v6e:2x2x1
jax: 0.10.0
libtpu: 0.0.40
codegen_flags: <defaults>
</compile_context>

<pallas_src>
import functools

import jax
import jax.numpy as jnp
from jax import lax
from jax.experimental import pallas as pl
from jax.experimental.pallas import tpu as pltpu


def _round_up(x: int, m: int) -> int:
    return ((x + m - 1) // m) * m


@functools.partial(jax.jit, static_argnames=("compute_dtype",))
def liquid_state_machine(inputs, liquid_state, w_liquid, w_readout, b_readout,
                         *, compute_dtype=jnp.bfloat16):
    """inputs: (B, T, input_size); liquid_state: (B, liquid_size).

    w_liquid : (liquid_size, input_size + liquid_size)   (no bias)
    w_readout: (output_size, liquid_size)
    b_readout: (output_size,)
    Returns (outputs (B, T, output_size) f32, final_state (B, liquid_size) f32).
    """
    B, T, input_size = inputs.shape
    L = liquid_state.shape[1]
    O = w_readout.shape[0]
    cd = jnp.dtype(compute_dtype)
    cd_bytes = cd.itemsize

    # ---- split the concat weight, pre-transpose (plain matmuls, no concat) -----
    w_in_t = jnp.transpose(w_liquid[:, :input_size])      # (I, L)
    w_rec_t = jnp.transpose(w_liquid[:, input_size:])     # (L, L)
    w_out_t = jnp.transpose(w_readout)                    # (L, O)

    # ---- static padding / tiling decisions --------------------------------------
    sub = 8 if cd_bytes >= 4 else 16                      # sublane multiple
    Lp = _round_up(max(L, 128), 128)                      # lane-dense liquid dim
    Bp = _round_up(B, sub)
    nb = 2 if Bp >= 128 else 1                            # batch chunks (v7x megacore)
    BB = _round_up(-(-Bp // nb), sub)
    Bp = BB * nb
    # Time steps per grid iteration: amortize per-step grid overhead while keeping
    # the double-buffered (pre, hseq) blocks within a few MiB of VMEM.
    per_step_bytes = 2 * 2 * BB * Lp * cd_bytes
    TS = int(max(1, min(T, 32, (4 << 20) // per_step_bytes)))
    nt = -(-T // TS)
    Tp = nt * TS
    needs_mask = Tp != T

    # ---- hoisted input projection: one large MXU matmul, off the critical path --
    x_tm = jnp.transpose(inputs, (1, 0, 2)).reshape(T * B, input_size)
    w_in_p = jnp.pad(w_in_t, ((0, 0), (0, Lp - L))).astype(cd)
    pre = jnp.dot(x_tm.astype(cd), w_in_p,
                  preferred_element_type=jnp.float32).astype(cd)
    pre = jnp.pad(pre.reshape(T, B, Lp), ((0, Tp - T), (0, Bp - B), (0, 0)))

    w_rec_p = jnp.pad(w_rec_t, ((0, Lp - L), (0, Lp - L))).astype(cd)
    h0_p = jnp.pad(liquid_state.astype(jnp.float32), ((0, Bp - B), (0, Lp - L)))

    # ---- recurrent Pallas kernel: h <- tanh(h @ W_rec^T + pre_t) ----------------
    def kernel(pre_ref, h0_ref, wrec_ref, hseq_ref, hfin_ref, h_scr):
        ti = pl.program_id(1)

        @pl.when(ti == 0)
        def _init():                          # new batch chunk -> reload h0
            h_scr[...] = h0_ref[...]

        w = wrec_ref[...]                     # (Lp, Lp), VMEM-resident
        t0 = ti * TS

        def step(s, h):
            z = jnp.dot(h.astype(w.dtype), w,
                        preferred_element_type=jnp.float32)
            z = z + pre_ref[s].astype(jnp.float32)
            h_new = jnp.tanh(z)               # EUP path, off the VALU slots
            if needs_mask:                    # freeze state on padded time steps
                h_new = jnp.where(t0 + s < T, h_new, h)
            hseq_ref[s] = h_new.astype(hseq_ref.dtype)
            return h_new

        h_last = lax.fori_loop(0, TS, step, h_scr[...], unroll=True)
        h_scr[...] = h_last

        @pl.when(ti == pl.num_programs(1) - 1)
        def _emit_final():
            hfin_ref[...] = h_last.astype(hfin_ref.dtype)

    # Resident VMEM budget (double-buffered streaming blocks + resident weights).
    vmem_bytes = (4 * TS * BB * Lp * cd_bytes      # pre + hseq blocks, x2 buffers
                  + 2 * Lp * Lp * cd_bytes         # W_rec^T
                  + 4 * BB * Lp * 4                # h0 + h_final
                  + BB * Lp * 4)                   # state scratch
    vmem_limit = int(min(max(2 * vmem_bytes, 8 << 20), 64 << 20))
    # NOTE: above liquid_size ~4-5k the resident W_rec^T no longer fits v7x's
    # 64 MiB VMEM; the liquid dim would then need an inner tiling axis.

    hseq_tm, h_fin = pl.pallas_call(
        kernel,
        out_shape=(
            jax.ShapeDtypeStruct((Tp, Bp, Lp), cd),
            jax.ShapeDtypeStruct((Bp, Lp), jnp.float32),
        ),
        grid_spec=pltpu.PrefetchScalarGridSpec(
            num_scalar_prefetch=0,
            grid=(nb, nt),
            in_specs=[
                pl.BlockSpec((TS, BB, Lp), lambda b, t: (t, b, 0)),   # pre-projected x
                pl.BlockSpec((BB, Lp), lambda b, t: (b, 0)),          # h0
                pl.BlockSpec((Lp, Lp), lambda b, t: (0, 0)),          # W_rec^T
            ],
            out_specs=[
                pl.BlockSpec((TS, BB, Lp), lambda b, t: (t, b, 0)),   # hidden sequence
                pl.BlockSpec((BB, Lp), lambda b, t: (b, 0)),          # final state
            ],
            scratch_shapes=[pltpu.VMEM((BB, Lp), jnp.float32)],
        ),
        compiler_params=pltpu.CompilerParams(
            dimension_semantics=("parallel", "arbitrary"),
            vmem_limit_bytes=vmem_limit,
        ),
    )(pre, h0_p, w_rec_p)

    # ---- hoisted readout: one batched matmul over the whole hidden sequence -----
    w_out_p = jnp.pad(w_out_t, ((0, Lp - L), (0, 0))).astype(cd)
    y = jnp.dot(hseq_tm.reshape(Tp * Bp, Lp), w_out_p,
                preferred_element_type=jnp.float32)
    y = y.reshape(Tp, Bp, O)[:T, :B, :] + b_readout[None, None, :].astype(jnp.float32)
    outputs = jnp.transpose(y, (1, 0, 2))            # (B, T, output_size)
    final_state = h_fin[:B, :L]
    return outputs, final_state


def _reference(inputs, h0, w_liquid, w_readout, b_readout):
    """Pure-JAX f32 reference mirroring the PyTorch loop exactly."""
    T = inputs.shape[1]
    h = h0
    outs = []
    for t in range(T):
        x_t = inputs[:, t, :]
        h = jnp.tanh(jnp.concatenate([x_t, h], axis=1) @ w_liquid.T)
        outs.append(h @ w_readout.T + b_readout)
    return jnp.stack(outs, axis=1), h


def _reference_mixed(inputs, h0, w_liquid, w_readout, b_readout, cd):
    """Reference with the same mixed precision as the kernel (bf16 operands,
    f32 state/accumulation) for validating the bf16 MXU path."""
    B, T, I = inputs.shape
    w_in_t = jnp.transpose(w_liquid[:, :I]).astype(cd)
    w_rec_t = jnp.transpose(w_liquid[:, I:]).astype(cd)
    w_out_t = jnp.transpose(w_readout).astype(cd)
    pre = jnp.dot(inputs.astype(cd), w_in_t,
                  preferred_element_type=jnp.float32).astype(cd).astype(jnp.float32)
    h = h0.astype(jnp.float32)
    outs = []
    for t in range(T):
        z = jnp.dot(h.astype(cd), w_rec_t,
                    preferred_element_type=jnp.float32) + pre[:, t, :]
        h = jnp.tanh(z)
        y = jnp.dot(h.astype(cd), w_out_t,
                    preferred_element_type=jnp.float32) + b_readout
        outs.append(y)
    return jnp.stack(outs, axis=1), h


if __name__ == "__main__":
    # Small shapes consistent with the module.
    B, T = 2, 8
    input_size, liquid_size, output_size = 16, 32, 8
    spectral_radius = 0.9

    key = jax.random.PRNGKey(0)
    k_x, k_wl, k_wr, k_br = jax.random.split(key, 4)

    inputs = jax.random.normal(k_x, (B, T, input_size), dtype=jnp.float32)
    h0 = jnp.zeros((B, liquid_size), dtype=jnp.float32)   # liquid_state=None -> zeros

    # Deterministic parameter init (matches __init__ shapes).
    w_liquid = spectral_radius * jax.random.normal(
        k_wl, (liquid_size, input_size + liquid_size), dtype=jnp.float32)
    bound = liquid_size ** -0.5
    w_readout = jax.random.uniform(
        k_wr, (output_size, liquid_size), minval=-bound, maxval=bound,
        dtype=jnp.float32)
    b_readout = jax.random.uniform(
        k_br, (output_size,), minval=-bound, maxval=bound, dtype=jnp.float32)

    # --- exact-precision path: validates semantics against the PyTorch-style loop
    out_f32, h_f32 = liquid_state_machine(
        inputs, h0, w_liquid, w_readout, b_readout, compute_dtype=jnp.float32)
    jax.block_until_ready((out_f32, h_f32))

    ref_out, ref_h = _reference(inputs, h0, w_liquid, w_readout, b_readout)
    assert out_f32.shape == (B, T, output_size)
    assert h_f32.shape == (B, liquid_size)
    assert jnp.allclose(out_f32, ref_out, atol=1e-4, rtol=1e-4)
    assert jnp.allclose(h_f32, ref_h, atol=1e-4, rtol=1e-4)

    # --- bf16 MXU path (default): validated against an equivalent-precision ref
    out_bf, h_bf = liquid_state_machine(
        inputs, h0, w_liquid, w_readout, b_readout, compute_dtype=jnp.bfloat16)
    jax.block_until_ready((out_bf, h_bf))

    mref_out, mref_h = _reference_mixed(
        inputs, h0, w_liquid, w_readout, b_readout, jnp.bfloat16)
    assert out_bf.shape == (B, T, output_size)
    assert h_bf.shape == (B, liquid_size)
    assert jnp.allclose(out_bf, mref_out, atol=2e-2, rtol=2e-2)
    assert jnp.allclose(h_bf, mref_h, atol=2e-2, rtol=2e-2)

    print("KERNEL_OK")
</pallas_src>

<mosaic_0001>
module attributes {stable_mosaic.version = 11 : i64} {
  func.func @kernel(%arg0: i32, %arg1: i32, %arg2: memref<8x8x128xf32, #tpu.memory_space<vmem>>, %arg3: memref<8x128xf32, #tpu.memory_space<vmem>>, %arg4: memref<128x128xf32, #tpu.memory_space<vmem>>, %arg5: memref<8x8x128xf32, #tpu.memory_space<vmem>>, %arg6: memref<8x128xf32, #tpu.memory_space<vmem>>, %arg7: memref<8x128xf32, #tpu.memory_space<vmem>>) attributes {dimension_semantics = [#tpu.dimension_semantics<parallel>, #tpu.dimension_semantics<arbitrary>], iteration_bounds = array<i64: 1, 1>, scalar_prefetch = 0 : i64, scratch_operands = 1 : i64, tpu.core_type = #tpu.core_type<tc>, window_params = [{transform_indices = @transform_0, window_bounds = array<i64: 8, 8, 128>}, {transform_indices = @transform_1, window_bounds = array<i64: 8, 128>}, {pipeline_mode = #tpu.pipeline_mode<synchronous>, transform_indices = @transform_2, window_bounds = array<i64: 128, 128>}, {transform_indices = @transform_3, window_bounds = array<i64: 8, 8, 128>}, {transform_indices = @transform_4, window_bounds = array<i64: 8, 128>}]} {
    %c0_i32 = arith.constant 0 : i32
    %0 = arith.cmpi eq, %arg1, %c0_i32 : i32
    %1 = arith.extui %0 : i1 to i32
    %c0_i32_0 = arith.constant 0 : i32
    %2 = arith.cmpi ne, %1, %c0_i32_0 : i32
    scf.if %2 {
      %c0_48 = arith.constant 0 : index
      %c0_49 = arith.constant 0 : index
      %89 = vector.load %arg3[%c0_48, %c0_49] : memref<8x128xf32, #tpu.memory_space<vmem>>, vector<8x128xf32>
      %c0_50 = arith.constant 0 : index
      %c0_51 = arith.constant 0 : index
      %90 = vector.load %arg7[%c0_50, %c0_51] : memref<8x128xf32, #tpu.memory_space<vmem>>, vector<8x128xf32>
      tpu.vector_store %arg7[%c0_50, %c0_51], %89 {strides = array<i32>} : memref<8x128xf32, #tpu.memory_space<vmem>>, vector<8x128xf32>,
    } else {
    }
    %c0 = arith.constant 0 : index
    %c0_1 = arith.constant 0 : index
    %3 = vector.load %arg4[%c0, %c0_1] : memref<128x128xf32, #tpu.memory_space<vmem>>, vector<128x128xf32>
    %c0_2 = arith.constant 0 : index
    %c0_3 = arith.constant 0 : index
    %4 = vector.load %arg7[%c0_2, %c0_3] : memref<8x128xf32, #tpu.memory_space<vmem>>, vector<8x128xf32>
    %c0_i32_4 = arith.constant 0 : i32
    %cst = arith.constant dense<0.000000e+00> : vector<8x128xf32>
    %5 = tpu.matmul %4, %3, %cst {dimension_numbers = #tpu.dot_dimension_numbers<[1], [0], [0], [1], [0, 0, 1, 1], [], []>} : vector<8x128xf32>, vector<128x128xf32>, vector<8x128xf32> -> vector<8x128xf32>
    %6 = arith.index_cast %c0_i32_4 : i32 to index
    %c0_5 = arith.constant 0 : index
    %c0_6 = arith.constant 0 : index
    %7 = vector.load %arg2[%6, %c0_5, %c0_6] : memref<8x8x128xf32, #tpu.memory_space<vmem>>, vector<1x8x128xf32>
    %8 = vector.shape_cast %7 : vector<1x8x128xf32> to vector<8x128xf32>
    %9 = arith.addf %5, %8 : vector<8x128xf32>
    %10 = math.tanh %9 : vector<8x128xf32>
    %11 = arith.index_cast %c0_i32_4 : i32 to index
    %c0_7 = arith.constant 0 : index
    %c0_8 = arith.constant 0 : index
    %12 = vector.load %arg5[%11, %c0_7, %c0_8] : memref<8x8x128xf32, #tpu.memory_space<vmem>>, vector<1x8x128xf32>
    %13 = vector.shape_cast %12 : vector<1x8x128xf32> to vector<8x128xf32>
    %14 = vector.shape_cast %10 : vector<8x128xf32> to vector<1x8x128xf32>
    tpu.vector_store %arg5[%11, %c0_7, %c0_8], %14 {strides = array<i32>} : memref<8x8x128xf32, #tpu.memory_space<vmem>>, vector<1x8x128xf32>,
    %c1_i32 = arith.constant 1 : i32
    %cst_9 = arith.constant dense<0.000000e+00> : vector<8x128xf32>
    %15 = tpu.matmul %10, %3, %cst_9 {dimension_numbers = #tpu.dot_dimension_numbers<[1], [0], [0], [1], [0, 0, 1, 1], [], []>} : vector<8x128xf32>, vector<128x128xf32>, vector<8x128xf32> -> vector<8x128xf32>
    %16 = arith.index_cast %c1_i32 : i32 to index
    %c0_10 = arith.constant 0 : index
    %c0_11 = arith.constant 0 : index
    %17 = vector.load %arg2[%16, %c0_10, %c0_11] : memref<8x8x128xf32, #tpu.memory_space<vmem>>, vector<1x8x128xf32>
    %18 = vector.shape_cast %17 : vector<1x8x128xf32> to vector<8x128xf32>
    %19 = arith.addf %15, %18 : vector<8x128xf32>
    %20 = math.tanh %19 : vector<8x128xf32>
    %21 = arith.index_cast %c1_i32 : i32 to index
    %c0_12 = arith.constant 0 : index
    %c0_13 = arith.constant 0 : index
    %22 = vector.load %arg5[%21, %c0_12, %c0_13] : memref<8x8x128xf32, #tpu.memory_space<vmem>>, vector<1x8x128xf32>
    %23 = vector.shape_cast %22 : vector<1x8x128xf32> to vector<8x128xf32>
    %24 = vector.shape_cast %20 : vector<8x128xf32> to vector<1x8x128xf32>
    tpu.vector_store %arg5[%21, %c0_12, %c0_13], %24 {strides = array<i32>} : memref<8x8x128xf32, #tpu.memory_space<vmem>>, vector<1x8x128xf32>,
    %c2_i32 = arith.constant 2 : i32
    %cst_14 = arith.constant dense<0.000000e+00> : vector<8x128xf32>
    %25 = tpu.matmul %20, %3, %cst_14 {dimension_numbers = #tpu.dot_dimension_numbers<[1], [0], [0], [1], [0, 0, 1, 1], [], []>} : vector<8x128xf32>, vector<128x128xf32>, vector<8x128xf32> -> vector<8x128xf32>
    %26 = arith.index_cast %c2_i32 : i32 to index
    %c0_15 = arith.constant 0 : index
    %c0_16 = arith.constant 0 : index
    %27 = vector.load %arg2[%26, %c0_15, %c0_16] : memref<8x8x128xf32, #tpu.memory_space<vmem>>, vector<1x8x128xf32>
    %28 = vector.shape_cast %27 : vector<1x8x128xf32> to vector<8x128xf32>
    %29 = arith.addf %25, %28 : vector<8x128xf32>
    %30 = math.tanh %29 : vector<8x128xf32>
    %31 = arith.index_cast %c2_i32 : i32 to index
    %c0_17 = arith.constant 0 : index
    %c0_18 = arith.constant 0 : index
    %32 = vector.load %arg5[%31, %c0_17, %c0_18] : memref<8x8x128xf32, #tpu.memory_space<vmem>>, vector<1x8x128xf32>
    %33 = vector.shape_cast %32 : vector<1x8x128xf32> to vector<8x128xf32>
    %34 = vector.shape_cast %30 : vector<8x128xf32> to vector<1x8x128xf32>
    tpu.vector_store %arg5[%31, %c0_17, %c0_18], %34 {strides = array<i32>} : memref<8x8x128xf32, #tpu.memory_space<vmem>>, vector<1x8x128xf32>,
    %c3_i32 = arith.constant 3 : i32
    %cst_19 = arith.constant dense<0.000000e+00> : vector<8x128xf32>
    %35 = tpu.matmul %30, %3, %cst_19 {dimension_numbers = #tpu.dot_dimension_numbers<[1], [0], [0], [1], [0, 0, 1, 1], [], []>} : vector<8x128xf32>, vector<128x128xf32>, vector<8x128xf32> -> vector<8x128xf32>
    %36 = arith.index_cast %c3_i32 : i32 to index
    %c0_20 = arith.constant 0 : index
    %c0_21 = arith.constant 0 : index
    %37 = vector.load %arg2[%36, %c0_20, %c0_21] : memref<8x8x128xf32, #tpu.memory_space<vmem>>, vector<1x8x128xf32>
    %38 = vector.shape_cast %37 : vector<1x8x128xf32> to vector<8x128xf32>
    %39 = arith.addf %35, %38 : vector<8x128xf32>
    %40 = math.tanh %39 : vector<8x128xf32>
    %41 = arith.index_cast %c3_i32 : i32 to index
    %c0_22 = arith.constant 0 : index
    %c0_23 = arith.constant 0 : index
    %42 = vector.load %arg5[%41, %c0_22, %c0_23] : memref<8x8x128xf32, #tpu.memory_space<vmem>>, vector<1x8x128xf32>
    %43 = vector.shape_cast %42 : vector<1x8x128xf32> to vector<8x128xf32>
    %44 = vector.shape_cast %40 : vector<8x128xf32> to vector<1x8x128xf32>
    tpu.vector_store %arg5[%41, %c0_22, %c0_23], %44 {strides = array<i32>} : memref<8x8x128xf32, #tpu.memory_space<vmem>>, vector<1x8x128xf32>,
    %c4_i32 = arith.constant 4 : i32
    %cst_24 = arith.constant dense<0.000000e+00> : vector<8x128xf32>
    %45 = tpu.matmul %40, %3, %cst_24 {dimension_numbers = #tpu.dot_dimension_numbers<[1], [0], [0], [1], [0, 0, 1, 1], [], []>} : vector<8x128xf32>, vector<128x128xf32>, vector<8x128xf32> -> vector<8x128xf32>
    %46 = arith.index_cast %c4_i32 : i32 to index
    %c0_25 = arith.constant 0 : index
    %c0_26 = arith.constant 0 : index
    %47 = vector.load %arg2[%46, %c0_25, %c0_26] : memref<8x8x128xf32, #tpu.memory_space<vmem>>, vector<1x8x128xf32>
    %48 = vector.shape_cast %47 : vector<1x8x128xf32> to vector<8x128xf32>
    %49 = arith.addf %45, %48 : vector<8x128xf32>
    %50 = math.tanh %49 : vector<8x128xf32>
    %51 = arith.index_cast %c4_i32 : i32 to index
    %c0_27 = arith.constant 0 : index
    %c0_28 = arith.constant 0 : index
    %52 = vector.load %arg5[%51, %c0_27, %c0_28] : memref<8x8x128xf32, #tpu.memory_space<vmem>>, vector<1x8x128xf32>
    %53 = vector.shape_cast %52 : vector<1x8x128xf32> to vector<8x128xf32>
    %54 = vector.shape_cast %50 : vector<8x128xf32> to vector<1x8x128xf32>
    tpu.vector_store %arg5[%51, %c0_27, %c0_28], %54 {strides = array<i32>} : memref<8x8x128xf32, #tpu.memory_space<vmem>>, vector<1x8x128xf32>,
    %c5_i32 = arith.constant 5 : i32
    %cst_29 = arith.constant dense<0.000000e+00> : vector<8x128xf32>
    %55 = tpu.matmul %50, %3, %cst_29 {dimension_numbers = #tpu.dot_dimension_numbers<[1], [0], [0], [1], [0, 0, 1, 1], [], []>} : vector<8x128xf32>, vector<128x128xf32>, vector<8x128xf32> -> vector<8x128xf32>
    %56 = arith.index_cast %c5_i32 : i32 to index
    %c0_30 = arith.constant 0 : index
    %c0_31 = arith.constant 0 : index
    %57 = vector.load %arg2[%56, %c0_30, %c0_31] : memref<8x8x128xf32, #tpu.memory_space<vmem>>, vector<1x8x128xf32>
    %58 = vector.shape_cast %57 : vector<1x8x128xf32> to vector<8x128xf32>
    %59 = arith.addf %55, %58 : vector<8x128xf32>
    %60 = math.tanh %59 : vector<8x128xf32>
    %61 = arith.index_cast %c5_i32 : i32 to index
    %c0_32 = arith.constant 0 : index
    %c0_33 = arith.constant 0 : index
    %62 = vector.load %arg5[%61, %c0_32, %c0_33] : memref<8x8x128xf32, #tpu.memory_space<vmem>>, vector<1x8x128xf32>
    %63 = vector.shape_cast %62 : vector<1x8x128xf32> to vector<8x128xf32>
    %64 = vector.shape_cast %60 : vector<8x128xf32> to vector<1x8x128xf32>
    tpu.vector_store %arg5[%61, %c0_32, %c0_33], %64 {strides = array<i32>} : memref<8x8x128xf32, #tpu.memory_space<vmem>>, vector<1x8x128xf32>,
    %c6_i32 = arith.constant 6 : i32
    %cst_34 = arith.constant dense<0.000000e+00> : vector<8x128xf32>
    %65 = tpu.matmul %60, %3, %cst_34 {dimension_numbers = #tpu.dot_dimension_numbers<[1], [0], [0], [1], [0, 0, 1, 1], [], []>} : vector<8x128xf32>, vector<128x128xf32>, vector<8x128xf32> -> vector<8x128xf32>
    %66 = arith.index_cast %c6_i32 : i32 to index
    %c0_35 = arith.constant 0 : index
    %c0_36 = arith.constant 0 : index
    %67 = vector.load %arg2[%66, %c0_35, %c0_36] : memref<8x8x128xf32, #tpu.memory_space<vmem>>, vector<1x8x128xf32>
    %68 = vector.shape_cast %67 : vector<1x8x128xf32> to vector<8x128xf32>
    %69 = arith.addf %65, %68 : vector<8x128xf32>
    %70 = math.tanh %69 : vector<8x128xf32>
    %71 = arith.index_cast %c6_i32 : i32 to index
    %c0_37 = arith.constant 0 : index
    %c0_38 = arith.constant 0 : index
    %72 = vector.load %arg5[%71, %c0_37, %c0_38] : memref<8x8x128xf32, #tpu.memory_space<vmem>>, vector<1x8x128xf32>
    %73 = vector.shape_cast %72 : vector<1x8x128xf32> to vector<8x128xf32>
    %74 = vector.shape_cast %70 : vector<8x128xf32> to vector<1x8x128xf32>
    tpu.vector_store %arg5[%71, %c0_37, %c0_38], %74 {strides = array<i32>} : memref<8x8x128xf32, #tpu.memory_space<vmem>>, vector<1x8x128xf32>,
    %c7_i32 = arith.constant 7 : i32
    %cst_39 = arith.constant dense<0.000000e+00> : vector<8x128xf32>
    %75 = tpu.matmul %70, %3, %cst_39 {dimension_numbers = #tpu.dot_dimension_numbers<[1], [0], [0], [1], [0, 0, 1, 1], [], []>} : vector<8x128xf32>, vector<128x128xf32>, vector<8x128xf32> -> vector<8x128xf32>
    %76 = arith.index_cast %c7_i32 : i32 to index
    %c0_40 = arith.constant 0 : index
    %c0_41 = arith.constant 0 : index
    %77 = vector.load %arg2[%76, %c0_40, %c0_41] : memref<8x8x128xf32, #tpu.memory_space<vmem>>, vector<1x8x128xf32>
    %78 = vector.shape_cast %77 : vector<1x8x128xf32> to vector<8x128xf32>
    %79 = arith.addf %75, %78 : vector<8x128xf32>
    %80 = math.tanh %79 : vector<8x128xf32>
    %81 = arith.index_cast %c7_i32 : i32 to index
    %c0_42 = arith.constant 0 : index
    %c0_43 = arith.constant 0 : index
    %82 = vector.load %arg5[%81, %c0_42, %c0_43] : memref<8x8x128xf32, #tpu.memory_space<vmem>>, vector<1x8x128xf32>
    %83 = vector.shape_cast %82 : vector<1x8x128xf32> to vector<8x128xf32>
    %84 = vector.shape_cast %80 : vector<8x128xf32> to vector<1x8x128xf32>
    tpu.vector_store %arg5[%81, %c0_42, %c0_43], %84 {strides = array<i32>} : memref<8x8x128xf32, #tpu.memory_space<vmem>>, vector<1x8x128xf32>,
    %c8_i32 = arith.constant 8 : i32
    %c0_44 = arith.constant 0 : index
    %c0_45 = arith.constant 0 : index
    %85 = vector.load %arg7[%c0_44, %c0_45] : memref<8x128xf32, #tpu.memory_space<vmem>>, vector<8x128xf32>
    tpu.vector_store %arg7[%c0_44, %c0_45], %80 {strides = array<i32>} : memref<8x128xf32, #tpu.memory_space<vmem>>, vector<8x128xf32>,
    %c0_i32_46 = arith.constant 0 : i32
    %86 = arith.cmpi eq, %arg1, %c0_i32_46 : i32
    %87 = arith.extui %86 : i1 to i32
    %c0_i32_47 = arith.constant 0 : i32
    %88 = arith.cmpi ne, %87, %c0_i32_47 : i32
    scf.if %88 {
      %c0_48 = arith.constant 0 : index
      %c0_49 = arith.constant 0 : index
      %89 = vector.load %arg6[%c0_48, %c0_49] : memref<8x128xf32, #tpu.memory_space<vmem>>, vector<8x128xf32>
      tpu.vector_store %arg6[%c0_48, %c0_49], %80 {strides = array<i32>} : memref<8x128xf32, #tpu.memory_space<vmem>>, vector<8x128xf32>,
    } else {
    }
    return
  }
  func.func @transform_0(%arg0: i32, %arg1: i32) -> (i32, i32, i32) {
    %c0_i32 = arith.constant 0 : i32
    %c0_i32_0 = arith.constant 0 : i32
    return %arg1, %arg0, %c0_i32 : i32, i32, i32
  }
  func.func @transform_1(%arg0: i32, %arg1: i32) -> (i32, i32) {
    %c0_i32 = arith.constant 0 : i32
    %c0_i32_0 = arith.constant 0 : i32
    return %arg0, %c0_i32 : i32, i32
  }
  func.func @transform_2(%arg0: i32, %arg1: i32) -> (i32, i32) {
    %c0_i32 = arith.constant 0 : i32
    %c0_i32_0 = arith.constant 0 : i32
    %c0_i32_1 = arith.constant 0 : i32
    return %c0_i32, %c0_i32_0 : i32, i32
  }
  func.func @transform_3(%arg0: i32, %arg1: i32) -> (i32, i32, i32) {
    %c0_i32 = arith.constant 0 : i32
    %c0_i32_0 = arith.constant 0 : i32
    return %arg1, %arg0, %c0_i32 : i32, i32, i32
  }
  func.func @transform_4(%arg0: i32, %arg1: i32) -> (i32, i32) {
    %c0_i32 = arith.constant 0 : i32
    %c0_i32_0 = arith.constant 0 : i32
    return %arg0, %c0_i32 : i32, i32
  }
}

</mosaic_0001>

<llo_original>
// kernel: liquid_state_machine.1
$region0: #{liquid_state_machine.1}
  #allocation0 [shape = 'u32[]', space=smem, size = 0x4, offset = 0x4, fixed_abs, tag = 'smem constant byte address 0x4 - core index']
  #allocation1 [shape = 'u32[144,128]{1,0:T(1,128)}', space=vmem, size = 0x12000, scoped, tag = 'internal scratch']
  #allocation2 [shape = 'f32[8,128]{1,0:T(8,128)}', space=vmem, size = 0x1000, scoped, tag = 'scratch operand']
  %s0 = inlined_call_operand.vmem [shape: f32[8,8,128], index: 0, kind: input, shape index: {}]
  %s1 = inlined_call_operand.vmem [shape: f32[8,128], index: 1, kind: input, shape index: {}]
  %s2 = inlined_call_operand.vmem [shape: f32[128,128], index: 2, kind: input, shape index: {}]
  %s3 = inlined_call_operand.vmem [shape: f32[8,8,128], index: 3, kind: output, shape index: {0}]
  %s4 = inlined_call_operand.vmem [shape: f32[8,128], index: 4, kind: output, shape index: {1}]
  %5 = xla_tuple %s3, %s4
  %s6 = sld [smem:[#allocation0]]
  $region38: #{liquid_state_machine.1} parent=0
    _
  %s8 = ssub.s32 1, %s6
  %s9 = scalar_select 0, %s8, %s6
  // Predicated region
  $region2: #{liquid_state_machine.1} parent=0 // pred_check
    _
  $region3: #{liquid_state_machine.1} parent=0 // pred_check_branch
    %11 = sbr.rel (0) target = $region5
  $region4: #{liquid_state_machine.1} parent=0 // pred_region
    _
  $region5: #{liquid_state_machine.1} parent=0 // pred_fallthru
    _
  // Predicated region
  $region6: #{liquid_state_machine.1} parent=0 // pred_check
    _
  $region7: #{liquid_state_machine.1} parent=0 // pred_check_branch
    %13 = sbr.rel (0) target = $region9
  $region8: #{liquid_state_machine.1} parent=0 // pred_region
    _
  $region9: #{liquid_state_machine.1} parent=0 // pred_fallthru
    _
  // Predicated region
  $region10: #{liquid_state_machine.1} parent=0 // pred_check
    _
  $region11: #{liquid_state_machine.1} parent=0 // pred_check_branch
    %15 = sbr.rel (0) target = $region13
  $region12: #{liquid_state_machine.1} parent=0 // pred_region
    _
  $region13: #{liquid_state_machine.1} parent=0 // pred_fallthru
    _
  %p16 = scmp.eq.s32.totalorder 0, 0
  // Predicated region
  $region14: #{liquid_state_machine.1} parent=0 // pred_check
    %p17 = pneg %p16
  $region15: #{liquid_state_machine.1} parent=0 // pred_check_branch
    %19 = sbr.rel (%p17) target = $region17
  $region16: #{liquid_state_machine.1} parent=0 // pred_region
    %v20 = vld [vmem:[%s1] sm:$0xff]
    %21 = vst [vmem:[#allocation2] sm:$0xff] %v20
  $region17: #{liquid_state_machine.1} parent=0 // pred_fallthru
    _
  %v22 = vld [vmem:[%s2] sm:$0xff]
  %v23 = vld [vmem:[%s2 + $0x8] sm:$0xff]
  %v24 = vld [vmem:[%s2 + $0x10] sm:$0xff]
  %v25 = vld [vmem:[%s2 + $0x18] sm:$0xff]
  %v26 = vld [vmem:[%s2 + $0x20] sm:$0xff]
  %v27 = vld [vmem:[%s2 + $0x28] sm:$0xff]
  %v28 = vld [vmem:[%s2 + $0x30] sm:$0xff]
  %v29 = vld [vmem:[%s2 + $0x38] sm:$0xff]
  %v30 = vld [vmem:[%s2 + $0x40] sm:$0xff]
  %v31 = vld [vmem:[%s2 + $0x48] sm:$0xff]
  %v32 = vld [vmem:[%s2 + $0x50] sm:$0xff]
  %v33 = vld [vmem:[%s2 + $0x58] sm:$0xff]
  %v34 = vld [vmem:[%s2 + $0x60] sm:$0xff]
  %v35 = vld [vmem:[%s2 + $0x68] sm:$0xff]
  %v36 = vld [vmem:[%s2 + $0x70] sm:$0xff]
  %v37 = vld [vmem:[%s2 + $0x78] sm:$0xff]
  %v38 = vld [vmem:[#allocation2] sm:$0xff]
  %v39 = vld [vmem:[%s0] sm:$0xff]
  %40 = vmatprep.subr.mxu0 0.0
  %41 = vmatpush1.msra.mxu0 %v37
  %42 = vmatprep.subr.mxu0 0.0
  %43 = vmatpush1.msra.mxu0 %v36
  %44 = vmatprep.subr.mxu0 0.0
  %45 = vmatpush1.msra.mxu0 %v35
  %46 = vmatprep.subr.mxu0 0.0
  %47 = vmatpush1.msra.mxu0 %v34
  %48 = vmatprep.subr.mxu0 0.0
  %49 = vmatpush1.msra.mxu0 %v33
  %50 = vmatprep.subr.mxu0 0.0
  %51 = vmatpush1.msra.mxu0 %v32
  %52 = vmatprep.subr.mxu0 0.0
  %53 = vmatpush1.msra.mxu0 %v31
  %54 = vmatprep.subr.mxu0 0.0
  %55 = vmatpush1.msra.mxu0 %v30
  %56 = vmatprep.subr.mxu0 0.0
  %57 = vmatpush1.msra.mxu0 %v29
  %58 = vmatprep.subr.mxu0 0.0
  %59 = vmatpush1.msra.mxu0 %v28
  %60 = vmatprep.subr.mxu0 0.0
  %61 = vmatpush1.msra.mxu0 %v27
  %62 = vmatprep.subr.mxu0 0.0
  %63 = vmatpush1.msra.mxu0 %v26
  %64 = vmatprep.subr.mxu0 0.0
  %65 = vmatpush1.msra.mxu0 %v25
  %66 = vmatprep.subr.mxu0 0.0
  %67 = vmatpush1.msra.mxu0 %v24
  %68 = vmatprep.subr.mxu0 0.0
  %69 = vmatpush1.msra.mxu0 %v23
  %70 = vmatprep.subr.mxu0 0.0
  %71 = vmatpush1.msra.mxu0 %v22
  %72 = vmatprep.subr.mxu0 0.0
  %73 = vmatpush2.msra.mxu0 0.0
  %74 = vmatprep.subr.mxu0 0.0
  %75 = vmatpush2.msra.mxu0 0.0
  %76 = vmatprep.subr.mxu0 0.0
  %77 = vmatpush2.msra.mxu0 0.0
  %78 = vmatprep.subr.mxu0 0.0
  %79 = vmatpush2.msra.mxu0 0.0
  %80 = vmatprep.subr.mxu0 0.0
  %81 = vmatpush2.msra.mxu0 0.0
  %82 = vmatprep.subr.mxu0 0.0
  %83 = vmatpush2.msra.mxu0 0.0
  %84 = vmatprep.subr.mxu0 0.0
  %85 = vmatpush2.msra.mxu0 0.0
  %86 = vmatprep.subr.mxu0 0.0
  %87 = vmatpush2.msra.mxu0 0.0
  %88 = vmatprep.subr.mxu0 0.0
  %89 = vmatpush2.msra.mxu0 0.0
  %90 = vmatprep.subr.mxu0 0.0
  %91 = vmatpush2.msra.mxu0 0.0
  %92 = vmatprep.subr.mxu0 0.0
  %93 = vmatpush2.msra.mxu0 0.0
  %94 = vmatprep.subr.mxu0 0.0
  %95 = vmatpush2.msra.mxu0 0.0
  %96 = vmatprep.subr.mxu0 0.0
  %97 = vmatpush2.msra.mxu0 0.0
  %98 = vmatprep.subr.mxu0 0.0
  %99 = vmatpush2.msra.mxu0 0.0
  %100 = vmatprep.subr.mxu0 0.0
  %101 = vmatpush2.msra.mxu0 0.0
  %102 = vmatprep.subr.mxu0 0.0
  %103 = vmatpush2.msra.mxu0 0.0
  %104 = vmatprep.mubr.f32.mxu0 0.0
  %105 = vmatmul.mubr.f32.gmra.mxu0 %v38
  %v106 = vpop.f32.mrf.mxu0
  %v107 = vadd.f32 %v39, %v106
  %v108 = vpop.f32.mrf.mxu0
  %109 = vdwg.mxu0
  %v110 = vtanh.pop %v107
  %111 = vst [vmem:[%s3] sm:$0xff] %v110
  %s112 = scalar_lea.vmem %s0, 8
  %v113 = vld [vmem:[%s112] sm:$0xff]
  %114 = vmatprep.subr.mxu0 0.0
  %115 = vmatpush1.msra.mxu0 %v37
  %116 = vmatprep.subr.mxu0 0.0
  %117 = vmatpush1.msra.mxu0 %v36
  %118 = vmatprep.subr.mxu0 0.0
  %119 = vmatpush1.msra.mxu0 %v35
  %120 = vmatprep.subr.mxu0 0.0
  %121 = vmatpush1.msra.mxu0 %v34
  %122 = vmatprep.subr.mxu0 0.0
  %123 = vmatpush1.msra.mxu0 %v33
  %124 = vmatprep.subr.mxu0 0.0
  %125 = vmatpush1.msra.mxu0 %v32
  %126 = vmatprep.subr.mxu0 0.0
  %127 = vmatpush1.msra.mxu0 %v31
  %128 = vmatprep.subr.mxu0 0.0
  %129 = vmatpush1.msra.mxu0 %v30
  %130 = vmatprep.subr.mxu0 0.0
  %131 = vmatpush1.msra.mxu0 %v29
  %132 = vmatprep.subr.mxu0 0.0
  %133 = vmatpush1.msra.mxu0 %v28
  %134 = vmatprep.subr.mxu0 0.0
  %135 = vmatpush1.msra.mxu0 %v27
  %136 = vmatprep.subr.mxu0 0.0
  %137 = vmatpush1.msra.mxu0 %v26
  %138 = vmatprep.subr.mxu0 0.0
  %139 = vmatpush1.msra.mxu0 %v25
  %140 = vmatprep.subr.mxu0 0.0
  %141 = vmatpush1.msra.mxu0 %v24
  %142 = vmatprep.subr.mxu0 0.0
  %143 = vmatpush1.msra.mxu0 %v23
  %144 = vmatprep.subr.mxu0 0.0
  %145 = vmatpush1.msra.mxu0 %v22
  %146 = vmatprep.subr.mxu0 0.0
  %147 = vmatpush2.msra.mxu0 0.0
  %148 = vmatprep.subr.mxu0 0.0
  %149 = vmatpush2.msra.mxu0 0.0
  %150 = vmatprep.subr.mxu0 0.0
  %151 = vmatpush2.msra.mxu0 0.0
  %152 = vmatprep.subr.mxu0 0.0
  %153 = vmatpush2.msra.mxu0 0.0
  %154 = vmatprep.subr.mxu0 0.0
  %155 = vmatpush2.msra.mxu0 0.0
  %156 = vmatprep.subr.mxu0 0.0
  %157 = vmatpush2.msra.mxu0 0.0
  %158 = vmatprep.subr.mxu0 0.0
  %159 = vmatpush2.msra.mxu0 0.0
  %160 = vmatprep.subr.mxu0 0.0
  %161 = vmatpush2.msra.mxu0 0.0
  %162 = vmatprep.subr.mxu0 0.0
  %163 = vmatpush2.msra.mxu0 0.0
  %164 = vmatprep.subr.mxu0 0.0
  %165 = vmatpush2.msra.mxu0 0.0
  %166 = vmatprep.subr.mxu0 0.0
  %167 = vmatpush2.msra.mxu0 0.0
  %168 = vmatprep.subr.mxu0 0.0
  %169 = vmatpush2.msra.mxu0 0.0
  %170 = vmatprep.subr.mxu0 0.0
  %171 = vmatpush2.msra.mxu0 0.0
  %172 = vmatprep.subr.mxu0 0.0
  %173 = vmatpush2.msra.mxu0 0.0
  %174 = vmatprep.subr.mxu0 0.0
  %175 = vmatpush2.msra.mxu0 0.0
  %176 = vmatprep.subr.mxu0 0.0
  %177 = vmatpush2.msra.mxu0 0.0
  %178 = vmatprep.mubr.f32.mxu0 0.0
  %179 = vmatmul.mubr.f32.gmra.mxu0 %v110
  %v180 = vpop.f32.mrf.mxu0
  %v181 = vadd.f32 %v113, %v180
  %v182 = vpop.f32.mrf.mxu0
  %183 = vdwg.mxu0
  %v184 = vtanh.pop %v181
  %s185 = scalar_lea.vmem %s3, 8
  %186 = vst [vmem:[%s185] sm:$0xff] %v184
  %s187 = scalar_lea.vmem %s0, 16
  %v188 = vld [vmem:[%s187] sm:$0xff]
  %189 = vmatprep.subr.mxu0 0.0
  %190 = vmatpush1.msra.mxu0 %v37
  %191 = vmatprep.subr.mxu0 0.0
  %192 = vmatpush1.msra.mxu0 %v36
  %193 = vmatprep.subr.mxu0 0.0
  %194 = vmatpush1.msra.mxu0 %v35
  %195 = vmatprep.subr.mxu0 0.0
  %196 = vmatpush1.msra.mxu0 %v34
  %197 = vmatprep.subr.mxu0 0.0
  %198 = vmatpush1.msra.mxu0 %v33
  %199 = vmatprep.subr.mxu0 0.0
  %200 = vmatpush1.msra.mxu0 %v32
  %201 = vmatprep.subr.mxu0 0.0
  %202 = vmatpush1.msra.mxu0 %v31
  %203 = vmatprep.subr.mxu0 0.0
  %204 = vmatpush1.msra.mxu0 %v30
  %205 = vmatprep.subr.mxu0 0.0
  %206 = vmatpush1.msra.mxu0 %v29
  %207 = vmatprep.subr.mxu0 0.0
  %208 = vmatpush1.msra.mxu0 %v28
  %209 = vmatprep.subr.mxu0 0.0
  %210 = vmatpush1.msra.mxu0 %v27
  %211 = vmatprep.subr.mxu0 0.0
  %212 = vmatpush1.msra.mxu0 %v26
  %213 = vmatprep.subr.mxu0 0.0
  %214 = vmatpush1.msra.mxu0 %v25
  %215 = vmatprep.subr.mxu0 0.0
  %216 = vmatpush1.msra.mxu0 %v24
  %217 = vmatprep.subr.mxu0 0.0
  %218 = vmatpush1.msra.mxu0 %v23
  %219 = vmatprep.subr.mxu0 0.0
  %220 = vmatpush1.msra.mxu0 %v22
  %221 = vmatprep.subr.mxu0 0.0
  %222 = vmatpush2.msra.mxu0 0.0
  %223 = vmatprep.subr.mxu0 0.0
  %224 = vmatpush2.msra.mxu0 0.0
  %225 = vmatprep.subr.mxu0 0.0
  %226 = vmatpush2.msra.mxu0 0.0
  %227 = vmatprep.subr.mxu0 0.0
  %228 = vmatpush2.msra.mxu0 0.0
  %229 = vmatprep.subr.mxu0 0.0
  %230 = vmatpush2.msra.mxu0 0.0
  %231 = vmatprep.subr.mxu0 0.0
  %232 = vmatpush2.msra.mxu0 0.0
  %233 = vmatprep.subr.mxu0 0.0
  %234 = vmatpush2.msra.mxu0 0.0
  %235 = vmatprep.subr.mxu0 0.0
  %236 = vmatpush2.msra.mxu0 0.0
  %237 = vmatprep.subr.mxu0 0.0
  %238 = vmatpush2.msra.mxu0 0.0
  %239 = vmatprep.subr.mxu0 0.0
  %240 = vmatpush2.msra.mxu0 0.0
  %241 = vmatprep.subr.mxu0 0.0
  %242 = vmatpush2.msra.mxu0 0.0
  %243 = vmatprep.subr.mxu0 0.0
  %244 = vmatpush2.msra.mxu0 0.0
  %245 = vmatprep.subr.mxu0 0.0
  %246 = vmatpush2.msra.mxu0 0.0
  %247 = vmatprep.subr.mxu0 0.0
  %248 = vmatpush2.msra.mxu0 0.0
  %249 = vmatprep.subr.mxu0 0.0
  %250 = vmatpush2.msra.mxu0 0.0
  %251 = vmatprep.subr.mxu0 0.0
  %252 = vmatpush2.msra.mxu0 0.0
  %253 = vmatprep.mubr.f32.mxu0 0.0
  %254 = vmatmul.mubr.f32.gmra.mxu0 %v184
  %v255 = vpop.f32.mrf.mxu0
  %v256 = vadd.f32 %v188, %v255
  %v257 = vpop.f32.mrf.mxu0
  %258 = vdwg.mxu0
  %v259 = vtanh.pop %v256
  %s260 = scalar_lea.vmem %s3, 16
  %261 = vst [vmem:[%s260] sm:$0xff] %v259
  %s262 = scalar_lea.vmem %s0, 24
  %v263 = vld [vmem:[%s262] sm:$0xff]
  %264 = vmatprep.subr.mxu0 0.0
  %265 = vmatpush1.msra.mxu0 %v37
  %266 = vmatprep.subr.mxu0 0.0
  %267 = vmatpush1.msra.mxu0 %v36
  %268 = vmatprep.subr.mxu0 0.0
  %269 = vmatpush1.msra.mxu0 %v35
  %270 = vmatprep.subr.mxu0 0.0
  %271 = vmatpush1.msra.mxu0 %v34
  %272 = vmatprep.subr.mxu0 0.0
  %273 = vmatpush1.msra.mxu0 %v33
  %274 = vmatprep.subr.mxu0 0.0
  %275 = vmatpush1.msra.mxu0 %v32
  %276 = vmatprep.subr.mxu0 0.0
  %277 = vmatpush1.msra.mxu0 %v31
  %278 = vmatprep.subr.mxu0 0.0
  %279 = vmatpush1.msra.mxu0 %v30
  %280 = vmatprep.subr.mxu0 0.0
  %281 = vmatpush1.msra.mxu0 %v29
  %282 = vmatprep.subr.mxu0 0.0
  %283 = vmatpush1.msra.mxu0 %v28
  %284 = vmatprep.subr.mxu0 0.0
  %285 = vmatpush1.msra.mxu0 %v27
  %286 = vmatprep.subr.mxu0 0.0
  %287 = vmatpush1.msra.mxu0 %v26
  %288 = vmatprep.subr.mxu0 0.0
  %289 = vmatpush1.msra.mxu0 %v25
  %290 = vmatprep.subr.mxu0 0.0
  %291 = vmatpush1.msra.mxu0 %v24
  %292 = vmatprep.subr.mxu0 0.0
  %293 = vmatpush1.msra.mxu0 %v23
  %294 = vmatprep.subr.mxu0 0.0
  %295 = vmatpush1.msra.mxu0 %v22
  %296 = vmatprep.subr.mxu0 0.0
  %297 = vmatpush2.msra.mxu0 0.0
  %298 = vmatprep.subr.mxu0 0.0
  %299 = vmatpush2.msra.mxu0 0.0
  %300 = vmatprep.subr.mxu0 0.0
  %301 = vmatpush2.msra.mxu0 0.0
  %302 = vmatprep.subr.mxu0 0.0
  %303 = vmatpush2.msra.mxu0 0.0
  %304 = vmatprep.subr.mxu0 0.0
  %305 = vmatpush2.msra.mxu0 0.0
  %306 = vmatprep.subr.mxu0 0.0
  %307 = vmatpush2.msra.mxu0 0.0
  %308 = vmatprep.subr.mxu0 0.0
  %309 = vmatpush2.msra.mxu0 0.0
  %310 = vmatprep.subr.mxu0 0.0
  %311 = vmatpush2.msra.mxu0 0.0
  %312 = vmatprep.subr.mxu0 0.0
  %313 = vmatpush2.msra.mxu0 0.0
  %314 = vmatprep.subr.mxu0 0.0
  %315 = vmatpush2.msra.mxu0 0.0
  %316 = vmatprep.subr.mxu0 0.0
  %317 = vmatpush2.msra.mxu0 0.0
  %318 = vmatprep.subr.mxu0 0.0
  %319 = vmatpush2.msra.mxu0 0.0
  %320 = vmatprep.subr.mxu0 0.0
  %321 = vmatpush2.msra.mxu0 0.0
  %322 = vmatprep.subr.mxu0 0.0
  %323 = vmatpush2.msra.mxu0 0.0
  %324 = vmatprep.subr.mxu0 0.0
  %325 = vmatpush2.msra.mxu0 0.0
  %326 = vmatprep.subr.mxu0 0.0
  %327 = vmatpush2.msra.mxu0 0.0
  %328 = vmatprep.mubr.f32.mxu0 0.0
  %329 = vmatmul.mubr.f32.gmra.mxu0 %v259
  %v330 = vpop.f32.mrf.mxu0
  %v331 = vadd.f32 %v263, %v330
  %v332 = vpop.f32.mrf.mxu0
  %333 = vdwg.mxu0
  %v334 = vtanh.pop %v331
  %s335 = scalar_lea.vmem %s3, 24
  %336 = vst [vmem:[%s335] sm:$0xff] %v334
  %s337 = scalar_lea.vmem %s0, 32
  %v338 = vld [vmem:[%s337] sm:$0xff]
  %339 = vmatprep.subr.mxu0 0.0
  %340 = vmatpush1.msra.mxu0 %v37
  %341 = vmatprep.subr.mxu0 0.0
  %342 = vmatpush1.msra.mxu0 %v36
  %343 = vmatprep.subr.mxu0 0.0
  %344 = vmatpush1.msra.mxu0 %v35
  %345 = vmatprep.subr.mxu0 0.0
  %346 = vmatpush1.msra.mxu0 %v34
  %347 = vmatprep.subr.mxu0 0.0
  %348 = vmatpush1.msra.mxu0 %v33
  %349 = vmatprep.subr.mxu0 0.0
  %350 = vmatpush1.msra.mxu0 %v32
  %351 = vmatprep.subr.mxu0 0.0
  %352 = vmatpush1.msra.mxu0 %v31
  %353 = vmatprep.subr.mxu0 0.0
  %354 = vmatpush1.msra.mxu0 %v30
  %355 = vmatprep.subr.mxu0 0.0
  %356 = vmatpush1.msra.mxu0 %v29
  %357 = vmatprep.subr.mxu0 0.0
  %358 = vmatpush1.msra.mxu0 %v28
  %359 = vmatprep.subr.mxu0 0.0
  %360 = vmatpush1.msra.mxu0 %v27
  %361 = vmatprep.subr.mxu0 0.0
  %362 = vmatpush1.msra.mxu0 %v26
  %363 = vmatprep.subr.mxu0 0.0
  %364 = vmatpush1.msra.mxu0 %v25
  %365 = vmatprep.subr.mxu0 0.0
  %366 = vmatpush1.msra.mxu0 %v24
  %367 = vmatprep.subr.mxu0 0.0
  %368 = vmatpush1.msra.mxu0 %v23
  %369 = vmatprep.subr.mxu0 0.0
  %370 = vmatpush1.msra.mxu0 %v22
  %371 = vmatprep.subr.mxu0 0.0
  %372 = vmatpush2.msra.mxu0 0.0
  %373 = vmatprep.subr.mxu0 0.0
  %374 = vmatpush2.msra.mxu0 0.0
  %375 = vmatprep.subr.mxu0 0.0
  %376 = vmatpush2.msra.mxu0 0.0
  %377 = vmatprep.subr.mxu0 0.0
  %378 = vmatpush2.msra.mxu0 0.0
  %379 = vmatprep.subr.mxu0 0.0
  %380 = vmatpush2.msra.mxu0 0.0
  %381 = vmatprep.subr.mxu0 0.0
  %382 = vmatpush2.msra.mxu0 0.0
  %383 = vmatprep.subr.mxu0 0.0
  %384 = vmatpush2.msra.mxu0 0.0
  %385 = vmatprep.subr.mxu0 0.0
  %386 = vmatpush2.msra.mxu0 0.0
  %387 = vmatprep.subr.mxu0 0.0
  %388 = vmatpush2.msra.mxu0 0.0
  %389 = vmatprep.subr.mxu0 0.0
  %390 = vmatpush2.msra.mxu0 0.0
  %391 = vmatprep.subr.mxu0 0.0
  %392 = vmatpush2.msra.mxu0 0.0
  %393 = vmatprep.subr.mxu0 0.0
  %394 = vmatpush2.msra.mxu0 0.0
  %395 = vmatprep.subr.mxu0 0.0
  %396 = vmatpush2.msra.mxu0 0.0
  %397 = vmatprep.subr.mxu0 0.0
  %398 = vmatpush2.msra.mxu0 0.0
  %399 = vmatprep.subr.mxu0 0.0
  %400 = vmatpush2.msra.mxu0 0.0
  %401 = vmatprep.subr.mxu0 0.0
  %402 = vmatpush2.msra.mxu0 0.0
  %403 = vmatprep.mubr.f32.mxu0 0.0
  %404 = vmatmul.mubr.f32.gmra.mxu0 %v334
  %v405 = vpop.f32.mrf.mxu0
  %v406 = vadd.f32 %v338, %v405
  %v407 = vpop.f32.mrf.mxu0
  %408 = vdwg.mxu0
  %v409 = vtanh.pop %v406
  %s410 = scalar_lea.vmem %s3, 32
  %411 = vst [vmem:[%s410] sm:$0xff] %v409
  %s412 = scalar_lea.vmem %s0, 40
  %v413 = vld [vmem:[%s412] sm:$0xff]
  %414 = vmatprep.subr.mxu0 0.0
  %415 = vmatpush1.msra.mxu0 %v37
  %416 = vmatprep.subr.mxu0 0.0
  %417 = vmatpush1.msra.mxu0 %v36
  %418 = vmatprep.subr.mxu0 0.0
  %419 = vmatpush1.msra.mxu0 %v35
  %420 = vmatprep.subr.mxu0 0.0
  %421 = vmatpush1.msra.mxu0 %v34
  %422 = vmatprep.subr.mxu0 0.0
  %423 = vmatpush1.msra.mxu0 %v33
  %424 = vmatprep.subr.mxu0 0.0
  %425 = vmatpush1.msra.mxu0 %v32
  %426 = vmatprep.subr.mxu0 0.0
  %427 = vmatpush1.msra.mxu0 %v31
  %428 = vmatprep.subr.mxu0 0.0
  %429 = vmatpush1.msra.mxu0 %v30
  %430 = vmatprep.subr.mxu0 0.0
  %431 = vmatpush1.msra.mxu0 %v29
  %432 = vmatprep.subr.mxu0 0.0
  %433 = vmatpush1.msra.mxu0 %v28
  %434 = vmatprep.subr.mxu0 0.0
  %435 = vmatpush1.msra.mxu0 %v27
  %436 = vmatprep.subr.mxu0 0.0
  %437 = vmatpush1.msra.mxu0 %v26
  %438 = vmatprep.subr.mxu0 0.0
  %439 = vmatpush1.msra.mxu0 %v25
  %440 = vmatprep.subr.mxu0 0.0
  %441 = vmatpush1.msra.mxu0 %v24
  %442 = vmatprep.subr.mxu0 0.0
  %443 = vmatpush1.msra.mxu0 %v23
  %444 = vmatprep.subr.mxu0 0.0
  %445 = vmatpush1.msra.mxu0 %v22
  %446 = vmatprep.subr.mxu0 0.0
  %447 = vmatpush2.msra.mxu0 0.0
  %448 = vmatprep.subr.mxu0 0.0
  %449 = vmatpush2.msra.mxu0 0.0
  %450 = vmatprep.subr.mxu0 0.0
  %451 = vmatpush2.msra.mxu0 0.0
  %452 = vmatprep.subr.mxu0 0.0
  %453 = vmatpush2.msra.mxu0 0.0
  %454 = vmatprep.subr.mxu0 0.0
  %455 = vmatpush2.msra.mxu0 0.0
  %456 = vmatprep.subr.mxu0 0.0
  %457 = vmatpush2.msra.mxu0 0.0
  %458 = vmatprep.subr.mxu0 0.0
  %459 = vmatpush2.msra.mxu0 0.0
  %460 = vmatprep.subr.mxu0 0.0
  %461 = vmatpush2.msra.mxu0 0.0
  %462 = vmatprep.subr.mxu0 0.0
  %463 = vmatpush2.msra.mxu0 0.0
  %464 = vmatprep.subr.mxu0 0.0
  %465 = vmatpush2.msra.mxu0 0.0
  %466 = vmatprep.subr.mxu0 0.0
  %467 = vmatpush2.msra.mxu0 0.0
  %468 = vmatprep.subr.mxu0 0.0
  %469 = vmatpush2.msra.mxu0 0.0
  %470 = vmatprep.subr.mxu0 0.0
  %471 = vmatpush2.msra.mxu0 0.0
  %472 = vmatprep.subr.mxu0 0.0
  %473 = vmatpush2.msra.mxu0 0.0
  %474 = vmatprep.subr.mxu0 0.0
  %475 = vmatpush2.msra.mxu0 0.0
  %476 = vmatprep.subr.mxu0 0.0
  %477 = vmatpush2.msra.mxu0 0.0
  %478 = vmatprep.mubr.f32.mxu0 0.0
  %479 = vmatmul.mubr.f32.gmra.mxu0 %v409
  %v480 = vpop.f32.mrf.mxu0
  %v481 = vadd.f32 %v413, %v480
  %v482 = vpop.f32.mrf.mxu0
  %483 = vdwg.mxu0
  %v484 = vtanh.pop %v481
  %s485 = scalar_lea.vmem %s3, 40
  %486 = vst [vmem:[%s485] sm:$0xff] %v484
  %s487 = scalar_lea.vmem %s0, 48
  %v488 = vld [vmem:[%s487] sm:$0xff]
  %489 = vmatprep.subr.mxu0 0.0
  %490 = vmatpush1.msra.mxu0 %v37
  %491 = vmatprep.subr.mxu0 0.0
  %492 = vmatpush1.msra.mxu0 %v36
  %493 = vmatprep.subr.mxu0 0.0
  %494 = vmatpush1.msra.mxu0 %v35
  %495 = vmatprep.subr.mxu0 0.0
  %496 = vmatpush1.msra.mxu0 %v34
  %497 = vmatprep.subr.mxu0 0.0
  %498 = vmatpush1.msra.mxu0 %v33
  %499 = vmatprep.subr.mxu0 0.0
  %500 = vmatpush1.msra.mxu0 %v32
  %501 = vmatprep.subr.mxu0 0.0
  %502 = vmatpush1.msra.mxu0 %v31
  %503 = vmatprep.subr.mxu0 0.0
  %504 = vmatpush1.msra.mxu0 %v30
  %505 = vmatprep.subr.mxu0 0.0
  %506 = vmatpush1.msra.mxu0 %v29
  %507 = vmatprep.subr.mxu0 0.0
  %508 = vmatpush1.msra.mxu0 %v28
  %509 = vmatprep.subr.mxu0 0.0
  %510 = vmatpush1.msra.mxu0 %v27
  %511 = vmatprep.subr.mxu0 0.0
  %512 = vmatpush1.msra.mxu0 %v26
  %513 = vmatprep.subr.mxu0 0.0
  %514 = vmatpush1.msra.mxu0 %v25
  %515 = vmatprep.subr.mxu0 0.0
  %516 = vmatpush1.msra.mxu0 %v24
  %517 = vmatprep.subr.mxu0 0.0
  %518 = vmatpush1.msra.mxu0 %v23
  %519 = vmatprep.subr.mxu0 0.0
  %520 = vmatpush1.msra.mxu0 %v22
  %521 = vmatprep.subr.mxu0 0.0
  %522 = vmatpush2.msra.mxu0 0.0
  %523 = vmatprep.subr.mxu0 0.0
  %524 = vmatpush2.msra.mxu0 0.0
  %525 = vmatprep.subr.mxu0 0.0
  %526 = vmatpush2.msra.mxu0 0.0
  %527 = vmatprep.subr.mxu0 0.0
  %528 = vmatpush2.msra.mxu0 0.0
  %529 = vmatprep.subr.mxu0 0.0
  %530 = vmatpush2.msra.mxu0 0.0
  %531 = vmatprep.subr.mxu0 0.0
  %532 = vmatpush2.msra.mxu0 0.0
  %533 = vmatprep.subr.mxu0 0.0
  %534 = vmatpush2.msra.mxu0 0.0
  %535 = vmatprep.subr.mxu0 0.0
  %536 = vmatpush2.msra.mxu0 0.0
  %537 = vmatprep.subr.mxu0 0.0
  %538 = vmatpush2.msra.mxu0 0.0
  %539 = vmatprep.subr.mxu0 0.0
  %540 = vmatpush2.msra.mxu0 0.0
  %541 = vmatprep.subr.mxu0 0.0
  %542 = vmatpush2.msra.mxu0 0.0
  %543 = vmatprep.subr.mxu0 0.0
  %544 = vmatpush2.msra.mxu0 0.0
  %545 = vmatprep.subr.mxu0 0.0
  %546 = vmatpush2.msra.mxu0 0.0
  %547 = vmatprep.subr.mxu0 0.0
  %548 = vmatpush2.msra.mxu0 0.0
  %549 = vmatprep.subr.mxu0 0.0
  %550 = vmatpush2.msra.mxu0 0.0
  %551 = vmatprep.subr.mxu0 0.0
  %552 = vmatpush2.msra.mxu0 0.0
  %553 = vmatprep.mubr.f32.mxu0 0.0
  %554 = vmatmul.mubr.f32.gmra.mxu0 %v484
  %v555 = vpop.f32.mrf.mxu0
  %v556 = vadd.f32 %v488, %v555
  %v557 = vpop.f32.mrf.mxu0
  %558 = vdwg.mxu0
  %v559 = vtanh.pop %v556
  %s560 = scalar_lea.vmem %s3, 48
  %561 = vst [vmem:[%s560] sm:$0xff] %v559
  %s562 = scalar_lea.vmem %s0, 56
  %v563 = vld [vmem:[%s562] sm:$0xff]
  %564 = vmatprep.subr.mxu0 0.0
  %565 = vmatpush1.msra.mxu0 %v37
  %566 = vmatprep.subr.mxu0 0.0
  %567 = vmatpush1.msra.mxu0 %v36
  %568 = vmatprep.subr.mxu0 0.0
  %569 = vmatpush1.msra.mxu0 %v35
  %570 = vmatprep.subr.mxu0 0.0
  %571 = vmatpush1.msra.mxu0 %v34
  %572 = vmatprep.subr.mxu0 0.0
  %573 = vmatpush1.msra.mxu0 %v33
  %574 = vmatprep.subr.mxu0 0.0
  %575 = vmatpush1.msra.mxu0 %v32
  %576 = vmatprep.subr.mxu0 0.0
  %577 = vmatpush1.msra.mxu0 %v31
  %578 = vmatprep.subr.mxu0 0.0
  %579 = vmatpush1.msra.mxu0 %v30
  %580 = vmatprep.subr.mxu0 0.0
  %581 = vmatpush1.msra.mxu0 %v29
  %582 = vmatprep.subr.mxu0 0.0
  %583 = vmatpush1.msra.mxu0 %v28
  %584 = vmatprep.subr.mxu0 0.0
  %585 = vmatpush1.msra.mxu0 %v27
  %586 = vmatprep.subr.mxu0 0.0
  %587 = vmatpush1.msra.mxu0 %v26
  %588 = vmatprep.subr.mxu0 0.0
  %589 = vmatpush1.msra.mxu0 %v25
  %590 = vmatprep.subr.mxu0 0.0
  %591 = vmatpush1.msra.mxu0 %v24
  %592 = vmatprep.subr.mxu0 0.0
  %593 = vmatpush1.msra.mxu0 %v23
  %594 = vmatprep.subr.mxu0 0.0
  %595 = vmatpush1.msra.mxu0 %v22
  %596 = vmatprep.subr.mxu0 0.0
  %597 = vmatpush2.msra.mxu0 0.0
  %598 = vmatprep.subr.mxu0 0.0
  %599 = vmatpush2.msra.mxu0 0.0
  %600 = vmatprep.subr.mxu0 0.0
  %601 = vmatpush2.msra.mxu0 0.0
  %602 = vmatprep.subr.mxu0 0.0
  %603 = vmatpush2.msra.mxu0 0.0
  %604 = vmatprep.subr.mxu0 0.0
  %605 = vmatpush2.msra.mxu0 0.0
  %606 = vmatprep.subr.mxu0 0.0
  %607 = vmatpush2.msra.mxu0 0.0
  %608 = vmatprep.subr.mxu0 0.0
  %609 = vmatpush2.msra.mxu0 0.0
  %610 = vmatprep.subr.mxu0 0.0
  %611 = vmatpush2.msra.mxu0 0.0
  %612 = vmatprep.subr.mxu0 0.0
  %613 = vmatpush2.msra.mxu0 0.0
  %614 = vmatprep.subr.mxu0 0.0
  %615 = vmatpush2.msra.mxu0 0.0
  %616 = vmatprep.subr.mxu0 0.0
  %617 = vmatpush2.msra.mxu0 0.0
  %618 = vmatprep.subr.mxu0 0.0
  %619 = vmatpush2.msra.mxu0 0.0
  %620 = vmatprep.subr.mxu0 0.0
  %621 = vmatpush2.msra.mxu0 0.0
  %622 = vmatprep.subr.mxu0 0.0
  %623 = vmatpush2.msra.mxu0 0.0
  %624 = vmatprep.subr.mxu0 0.0
  %625 = vmatpush2.msra.mxu0 0.0
  %626 = vmatprep.subr.mxu0 0.0
  %627 = vmatpush2.msra.mxu0 0.0
  %628 = vmatprep.mubr.f32.mxu0 0.0
  %629 = vmatmul.mubr.f32.gmra.mxu0 %v559
  %v630 = vpop.f32.mrf.mxu0
  %v631 = vadd.f32 %v563, %v630
  %v632 = vpop.f32.mrf.mxu0
  %633 = vdwg.mxu0
  %v634 = vtanh.pop %v631
  %s635 = scalar_lea.vmem %s3, 56
  %636 = vst [vmem:[%s635] sm:$0xff] %v634
  %637 = vst [vmem:[#allocation2] sm:$0xff] %v634
  // Predicated region
  $region18: #{liquid_state_machine.1} parent=0 // pred_check
    %p638 = pneg %p16
  $region19: #{liquid_state_machine.1} parent=0 // pred_check_branch
    %640 = sbr.rel (%p638) target = $region21
  $region20: #{liquid_state_machine.1} parent=0 // pred_region
    %641 = vst [vmem:[%s4] sm:$0xff] %v634
  $region21: #{liquid_state_machine.1} parent=0 // pred_fallthru
    _
  // Predicated region
  $region22: #{liquid_state_machine.1} parent=0 // pred_check
    _
  $region23: #{liquid_state_machine.1} parent=0 // pred_check_branch
    %643 = sbr.rel (0) target = $region25
  $region24: #{liquid_state_machine.1} parent=0 // pred_region
    _
  $region25: #{liquid_state_machine.1} parent=0 // pred_fallthru
    _
  // Predicated region
  $region26: #{liquid_state_machine.1} parent=0 // pred_check
    _
  $region27: #{liquid_state_machine.1} parent=0 // pred_check_branch
    %645 = sbr.rel (0) target = $region29
  $region28: #{liquid_state_machine.1} parent=0 // pred_region
    _
  $region29: #{liquid_state_machine.1} parent=0 // pred_fallthru
    _
  // Predicated region
  $region30: #{liquid_state_machine.1} parent=0 // pred_check
    _
  $region31: #{liquid_state_machine.1} parent=0 // pred_check_branch
    %647 = sbr.rel (0) target = $region33
  $region32: #{liquid_state_machine.1} parent=0 // pred_region
    _
  $region33: #{liquid_state_machine.1} parent=0 // pred_fallthru
    _
  // Predicated region
  $region34: #{liquid_state_machine.1} parent=0 // pred_check
    _
  $region35: #{liquid_state_machine.1} parent=0 // pred_check_branch
    %649 = sbr.rel (0) target = $region37
  $region36: #{liquid_state_machine.1} parent=0 // pred_region
    _
  $region37: #{liquid_state_machine.1} parent=0 // pred_fallthru
    _

</llo_original>
